<compile_context>
chip_gen: v7x
topology: tpu7x:2x2x1
jax: 0.10.0
libtpu: 0.0.40
codegen_flags: <defaults>
</compile_context>

<pallas_src>
import math
import functools

import jax
import jax.numpy as jnp
from jax import lax
from jax.experimental import pallas as pl
from jax.experimental.pallas import tpu as pltpu

RELU_FLAG = False            # mirrors config.relu_flag: False -> erf-GELU, True -> ReLU
LN_EPS = 1e-5                # torch.nn.LayerNorm default eps
INV_SQRT2 = 1.0 / math.sqrt(2.0)
NEG_INF = -1e10              # masked_fill value used by the module


# ----------------------------------------------------------------------------- helpers
def _round_up(n, m):
    return ((n + m - 1) // m) * m


def _vmem_capacity():
    try:
        return int(pltpu.get_tpu_info().vmem_capacity_bytes)
    except Exception:
        return 64 << 20      # conservative (v7x-sized) default


def _block_m_cap(vmem_cap):
    # 128-MiB parts (v5e/v6e) take bigger row tiles (~85% of HBM roofline at 512-1024);
    # 64-MiB v7x stays at 256 to leave headroom for resident weights.
    return 1024 if vmem_cap >= (100 << 20) else 256


def _choose_block_m(m, cap):
    """Multiple-of-8 row tile that divides round_up(m, 8); prefer >= 2 grid steps (v7x has 2 TCs)."""
    m8 = _round_up(max(int(m), 1), 8)
    divs = [d for d in range(8, min(cap, m8) + 1, 8) if m8 % d == 0]
    if not divs:
        return min(cap, m8)
    two_plus = [d for d in divs if m8 // d >= 2]
    return max(two_plus) if two_plus else max(divs)


def _choose_tile_pf(pf, hid, block_m, vmem_cap):
    budget = vmem_cap // 2
    for cand in (1024, 512, 256, 128):
        if pf % cand == 0:
            need = 4 * (2 * block_m * hid + 2 * hid * cand + 2 * cand * hid
                        + 2 * block_m * cand + 2 * block_m * hid)
            if need <= budget:
                return cand
    return pf                               # small / irregular pf: single full column block


def _pad_rows(x2d, m_pad):
    m = x2d.shape[0]
    if m_pad == m:
        return x2d
    return jnp.pad(x2d, ((0, m_pad - m), (0, 0)))


def _vmem_limit(need_bytes, vmem_cap):
    cap = max(int(0.75 * vmem_cap), 32 << 20)
    return int(min(max(int(need_bytes) + (4 << 20), 32 << 20), cap))


# -------------------------------------------------------------- fused QKV projection
def _qkv_proj_kernel(x_ref, w_ref, b_ref, o_ref):
    # x: (block_m, hid); w: (1, hid, hid); b: (1, 1, hid); o: (1, block_m, hid)
    o_ref[0] = (jnp.dot(x_ref[...], w_ref[0], preferred_element_type=jnp.float32)
                + b_ref[0]).astype(o_ref.dtype)


def qkv_projection(x2d, wqkv, bqkv, *, vmem_cap):
    """x2d: [M, hid], wqkv: [3, hid, hid], bqkv: [3, 1, hid].  Returns [3, M, hid]."""
    M, hid = x2d.shape
    block_m = _choose_block_m(M, _block_m_cap(vmem_cap))
    m_pad = _round_up(M, block_m)
    xp = _pad_rows(x2d, m_pad)

    f32b = 4
    need = f32b * (2 * block_m * hid         # x tiles (resident across the qkv axis)
                   + 2 * hid * hid           # per-projection weight (double-buffered)
                   + 2 * hid                 # bias
                   + 2 * block_m * hid)      # out tiles
    vmem = _vmem_limit(need, vmem_cap)
    # TODO(synk): for very large hid on v7x, additionally tile the [hid, hid] weight columns.

    out = pl.pallas_call(
        _qkv_proj_kernel,
        out_shape=jax.ShapeDtypeStruct((3, m_pad, hid), x2d.dtype),
        grid_spec=pltpu.PrefetchScalarGridSpec(
            num_scalar_prefetch=0,
            grid=(m_pad // block_m, 3),
            in_specs=[
                pl.BlockSpec((block_m, hid), lambda i, j: (i, 0)),      # x resident over j
                pl.BlockSpec((1, hid, hid), lambda i, j: (j, 0, 0)),    # Wq/Wk/Wv slice
                pl.BlockSpec((1, 1, hid), lambda i, j: (j, 0, 0)),
            ],
            out_specs=pl.BlockSpec((1, block_m, hid), lambda i, j: (j, i, 0)),
        ),
        compiler_params=pltpu.CompilerParams(
            dimension_semantics=("parallel", "parallel"),
            vmem_limit_bytes=vmem),
    )(xp, wqkv, bqkv)
    return out if m_pad == M else out[:, :M, :]


# -------------------------------- attention + fc_o + residual + LayerNorm (fused)
def _attn_fc_o_ln_kernel(q_ref, k_ref, v_ref, mask_ref, wo_ref, bo_ref,
                         res_ref, g_ref, beta_ref, o_ref, *, n_heads, scale, eps):
    # q/k/v: (1, 1, S, hid); mask: (1, 1, 1, S); wo: (hid, hid); bo/g/beta: (1, hid)
    # res: (1, S, hid); out: (1, S, hid)
    hid = q_ref.shape[3]
    hd = hid // n_heads

    q = q_ref[0, 0]                          # (S, hid), lane-dense
    k = k_ref[0, 0]
    v = v_ref[0, 0]
    key_mask = mask_ref[0, 0]                # (1, S) -> broadcast over query rows & heads

    acc = jnp.zeros((q.shape[0], hid), jnp.float32)
    for h in range(n_heads):                 # static unroll; per-head static lane slices
        lo = h * hd
        qh = q[:, lo:lo + hd]
        kh = k[:, lo:lo + hd]
        vh = v[:, lo:lo + hd]
        # energy = Qh @ Kh^T / sqrt(head_dim)
        e = lax.dot_general(qh, kh, (((1,), (1,)), ((), ())),
                            preferred_element_type=jnp.float32) * scale
        e = jnp.where(key_mask == 0, NEG_INF, e)
        m = jnp.max(e, axis=-1, keepdims=True)
        p = jnp.exp(e - m)
        l = jnp.sum(p, axis=-1, keepdims=True)
        # dropout(attention): identity in eval mode
        # TODO(synk): training-mode dropout (pltpu.prng_* mask + scaling) not implemented.
        ctx = jnp.dot(p, vh, preferred_element_type=jnp.float32)
        ctx = ctx * pl.reciprocal(l, approx=False)       # normalize (S, hd) not (S, S)
        # fc_o fused per head: sum_h ctx_h @ Wo[h*hd:(h+1)*hd, :]
        acc = acc + jnp.dot(ctx, wo_ref[lo:lo + hd, :],
                            preferred_element_type=jnp.float32)

    # residual + LayerNorm (dropout identity in eval)
    z = acc + bo_ref[...] + res_ref[0].astype(jnp.float32)
    mean = jnp.mean(z, axis=-1, keepdims=True)
    zc = z - mean
    var = jnp.mean(zc * zc, axis=-1, keepdims=True)
    o_ref[0] = (zc * lax.rsqrt(var + eps) * g_ref[...] + beta_ref[...]).astype(o_ref.dtype)


def attention_fc_o_layernorm(qkv3, src_mask, src, prep, n_heads, *, vmem_cap):
    """qkv3: [3, B, S, hid]; src: [B, S, hid]; src_mask: [B, 1, 1, S].
    Returns LayerNorm(src + fc_o(multi_head_attention))."""
    B, S, hid = src.shape
    head_dim = hid // n_heads
    scale = 1.0 / math.sqrt(head_dim)

    if src_mask.shape != (B, 1, 1, S):
        # TODO(synk): general [B, 1, Sq, Sk] masks would need a per-row mask block.
        raise NotImplementedError("expected a [batch, 1, 1, seq] key-padding mask")
    mask = src_mask.astype(jnp.int32)

    f32b = 4
    need = f32b * (6 * S * hid        # q/k/v blocks, double-buffered
                   + 2 * S * hid      # residual
                   + 2 * S * hid      # output
                   + 2 * S            # mask
                   + 2 * hid * hid    # wo
                   + 8 * hid          # biases / LN params
                   + 4 * S * S        # energy / softmax temporaries (margin)
                   + 2 * S * hid)     # accumulator + ctx temporaries
    vmem = _vmem_limit(need, vmem_cap)
    # TODO(synk): for seq >~ 1024, switch to a KV grid axis with online-softmax (flash-style)
    # accumulation so the (S, S) scores never live in VMEM at once.

    return pl.pallas_call(
        functools.partial(_attn_fc_o_ln_kernel, n_heads=n_heads, scale=scale, eps=LN_EPS),
        out_shape=jax.ShapeDtypeStruct((B, S, hid), src.dtype),
        grid_spec=pltpu.PrefetchScalarGridSpec(
            num_scalar_prefetch=0,
            grid=(B,),
            in_specs=[
                pl.BlockSpec((1, 1, S, hid), lambda b: (0, b, 0, 0)),   # Q slab
                pl.BlockSpec((1, 1, S, hid), lambda b: (1, b, 0, 0)),   # K slab
                pl.BlockSpec((1, 1, S, hid), lambda b: (2, b, 0, 0)),   # V slab
                pl.BlockSpec((1, 1, 1, S), lambda b: (b, 0, 0, 0)),     # key-padding mask row
                pl.BlockSpec((hid, hid), lambda b: (0, 0)),             # Wo (resident)
                pl.BlockSpec((1, hid), lambda b: (0, 0)),               # bo
                pl.BlockSpec((1, S, hid), lambda b: (b, 0, 0)),         # residual (src)
                pl.BlockSpec((1, hid), lambda b: (0, 0)),               # ln gamma
                pl.BlockSpec((1, hid), lambda b: (0, 0)),               # ln beta
            ],
            out_specs=pl.BlockSpec((1, S, hid), lambda b: (b, 0, 0)),
        ),
        compiler_params=pltpu.CompilerParams(
            dimension_semantics=("parallel",),
            vmem_limit_bytes=vmem),
    )(qkv3, qkv3, qkv3, mask, prep["wo"], prep["bo"], src, prep["ln_g"], prep["ln_b"])


# ---------------------------------- FFN + residual + LayerNorm (fused, pf-axis reduce)
def _ffn_ln_kernel(x_ref, w1_ref, b1_ref, w2_ref, b2_ref, g_ref, beta_ref, o_ref,
                   *, relu_flag, eps):
    j = pl.program_id(1)

    @pl.when(j == 0)
    def _():
        o_ref[...] = jnp.zeros_like(o_ref)

    # fc_1 column block: [block_m, hid] @ [hid, tile_pf] + b1_blk
    h = (jnp.dot(x_ref[...], w1_ref[...], preferred_element_type=jnp.float32)
         + b1_ref[...])
    if relu_flag:
        h = jnp.maximum(h, 0.0)
    else:
        # gelu(x) = x * 0.5 * (1 + erf(x * (1/sqrt(2))))  -- divide folded into a mul
        h = h * 0.5 * (1.0 + lax.erf(h * INV_SQRT2))
    # dropout: identity in eval mode
    # TODO(synk): training-mode dropout (pltpu.prng_* mask + scaling) not implemented.

    # partial fc_2 accumulated directly into the resident f32 output block (no scratch)
    o_ref[...] += jnp.dot(h, w2_ref[...], preferred_element_type=jnp.float32)

    @pl.when(j == pl.num_programs(1) - 1)
    def _():
        # finalize: + b2, residual (the FFN input itself), LayerNorm
        z = o_ref[...] + b2_ref[...] + x_ref[...]
        mean = jnp.mean(z, axis=-1, keepdims=True)
        zc = z - mean
        var = jnp.mean(zc * zc, axis=-1, keepdims=True)
        o_ref[...] = (zc * lax.rsqrt(var + eps) * g_ref[...] + beta_ref[...]).astype(o_ref.dtype)


def ffn_layernorm(x2d, prep, *, relu_flag, vmem_cap):
    """Returns LayerNorm(x + fc2(act(fc1(x)))) for x2d: [M, hid] (f32)."""
    M, hid = x2d.shape
    pf = prep["w1"].shape[1]
    assert x2d.dtype == jnp.float32  # f32 output block doubles as the accumulator

    block_m = _choose_block_m(M, _block_m_cap(vmem_cap))
    m_pad = _round_up(M, block_m)
    xp = _pad_rows(x2d, m_pad)
    tile_pf = _choose_tile_pf(pf, hid, block_m, vmem_cap)

    f32b = 4
    need = f32b * (2 * block_m * hid          # x tiles
                   + 2 * hid * tile_pf        # w1 column tiles
                   + 2 * tile_pf * hid        # w2 row tiles
                   + 2 * tile_pf + 6 * hid    # biases / LN params
                   + 2 * block_m * hid        # output block (+ writeback)
                   + 2 * block_m * tile_pf)   # live h intermediate (margin)
    vmem = _vmem_limit(need, vmem_cap)

    out = pl.pallas_call(
        functools.partial(_ffn_ln_kernel, relu_flag=relu_flag, eps=LN_EPS),
        out_shape=jax.ShapeDtypeStruct((m_pad, hid), x2d.dtype),
        grid_spec=pltpu.PrefetchScalarGridSpec(
            num_scalar_prefetch=0,
            grid=(m_pad // block_m, pf // tile_pf),
            in_specs=[
                pl.BlockSpec((block_m, hid), lambda i, j: (i, 0)),
                pl.BlockSpec((hid, tile_pf), lambda i, j: (0, j)),
                pl.BlockSpec((1, tile_pf), lambda i, j: (0, j)),
                pl.BlockSpec((tile_pf, hid), lambda i, j: (j, 0)),
                pl.BlockSpec((1, hid), lambda i, j: (0, 0)),
                pl.BlockSpec((1, hid), lambda i, j: (0, 0)),
                pl.BlockSpec((1, hid), lambda i, j: (0, 0)),
            ],
            out_specs=pl.BlockSpec((block_m, hid), lambda i, j: (i, 0)),
        ),
        compiler_params=pltpu.CompilerParams(
            dimension_semantics=("parallel", "arbitrary"),
            vmem_limit_bytes=vmem),
    )(xp, prep["w1"], prep["b1"], prep["w2"], prep["b2"], prep["ln_g"], prep["ln_b"])
    return out if m_pad == M else out[:M]


# ------------------------------------------------------------------- full encoder layer
def prepare_params(p):
    """One-time parameter prep: stack QKV weights, reshape biases/LN params (no per-call glue)."""
    hid = p["wq"].shape[0]
    pf = p["w1"].shape[1]
    return {
        "wqkv": jnp.stack([p["wq"], p["wk"], p["wv"]], axis=0),            # [3, hid, hid]
        "bqkv": jnp.stack([p["bq"], p["bk"], p["bv"]], axis=0).reshape(3, 1, hid),
        "wo": p["wo"],
        "bo": p["bo"].reshape(1, hid),
        "w1": p["w1"],
        "b1": p["b1"].reshape(1, pf),
        "w2": p["w2"],
        "b2": p["b2"].reshape(1, hid),
        "ln_g": p["ln_g"].reshape(1, hid),
        "ln_b": p["ln_b"].reshape(1, hid),
    }


def encoder_layer_forward(src, src_mask, prep, n_heads, *, relu_flag=RELU_FLAG):
    """src: [batch, seq, hid] f32.  src_mask: [batch, 1, 1, seq] (key-padding mask)."""
    B, S, hid = src.shape
    M = B * S
    vmem_cap = _vmem_capacity()

    x2d = src.reshape(M, hid)

    # 1) fused QKV projection -> [3, M, hid]; reshape to [3, B, S, hid] is free
    qkv = qkv_projection(x2d, prep["wqkv"], prep["bqkv"], vmem_cap=vmem_cap)
    qkv3 = qkv.reshape(3, B, S, hid)

    # 2) attention + fc_o + residual + LayerNorm (single kernel, lane-dense output)
    x1 = attention_fc_o_layernorm(qkv3, src_mask, src, prep, n_heads, vmem_cap=vmem_cap)

    # 3) FFN + residual + LayerNorm (single kernel; same LayerNorm params, as in PyTorch)
    out2d = ffn_layernorm(x1.reshape(M, hid), prep, relu_flag=relu_flag, vmem_cap=vmem_cap)
    return out2d.reshape(B, S, hid)


# --------------------------------------------------------------------------- reference
def _reference_encoder_layer(src, src_mask, params, n_heads, relu_flag=RELU_FLAG):
    B, S, hid = src.shape
    head_dim = hid // n_heads

    def lin(x, w, b):
        return x @ w + b

    def heads(t):
        return t.reshape(B, S, n_heads, head_dim).transpose(0, 2, 1, 3)

    q, k, v = (heads(lin(src, params["wq"], params["bq"])),
               heads(lin(src, params["wk"], params["bk"])),
               heads(lin(src, params["wv"], params["bv"])))
    energy = jnp.einsum("bhqd,bhkd->bhqk", q, k) / math.sqrt(head_dim)
    energy = jnp.where(src_mask == 0, NEG_INF, energy)
    attn = jax.nn.softmax(energy, axis=-1)
    ctx = jnp.einsum("bhqk,bhkd->bhqd", attn, v)
    ctx = ctx.transpose(0, 2, 1, 3).reshape(B, S, hid)
    attn_out = lin(ctx, params["wo"], params["bo"])

    def layer_norm(x, g, b):
        mean = x.mean(-1, keepdims=True)
        var = ((x - mean) ** 2).mean(-1, keepdims=True)
        return (x - mean) / jnp.sqrt(var + LN_EPS) * g + b

    x1 = layer_norm(src + attn_out, params["ln_g"], params["ln_b"])
    h = lin(x1, params["w1"], params["b1"])
    if relu_flag:
        h = jnp.maximum(h, 0.0)
    else:
        h = h * 0.5 * (1.0 + lax.erf(h * INV_SQRT2))
    ffn = lin(h, params["w2"], params["b2"])
    return layer_norm(x1 + ffn, params["ln_g"], params["ln_b"])


def _init_linear(key, in_dim, out_dim):
    """nn.Linear-style init U(-1/sqrt(in), 1/sqrt(in)); weight stored [in, out]."""
    kw, kb = jax.random.split(key)
    bound = 1.0 / math.sqrt(in_dim)
    w = jax.random.uniform(kw, (in_dim, out_dim), jnp.float32, -bound, bound)
    b = jax.random.uniform(kb, (out_dim,), jnp.float32, -bound, bound)
    return w, b


if __name__ == "__main__":
    batch, seq, hid_dim, n_heads, pf_dim = 2, 8, 32, 4, 64

    key = jax.random.PRNGKey(0)
    kx, kq, kk, kv, ko, k1, k2 = jax.random.split(key, 7)

    src = jax.random.normal(kx, (batch, seq, hid_dim), jnp.float32)

    params = {}
    params["wq"], params["bq"] = _init_linear(kq, hid_dim, hid_dim)
    params["wk"], params["bk"] = _init_linear(kk, hid_dim, hid_dim)
    params["wv"], params["bv"] = _init_linear(kv, hid_dim, hid_dim)
    params["wo"], params["bo"] = _init_linear(ko, hid_dim, hid_dim)
    params["w1"], params["b1"] = _init_linear(k1, hid_dim, pf_dim)
    params["w2"], params["b2"] = _init_linear(k2, pf_dim, hid_dim)
    params["ln_g"] = jnp.ones((hid_dim,), jnp.float32)    # nn.LayerNorm default init
    params["ln_b"] = jnp.zeros((hid_dim,), jnp.float32)

    # padding mask [batch, 1, 1, seq]: batch 1 has its last two positions masked out
    lengths = jnp.array([seq, seq - 2])
    src_mask = (jnp.arange(seq)[None, :] < lengths[:, None]).astype(jnp.int32)
    src_mask = src_mask[:, None, None, :]

    prep = prepare_params(params)            # one-time: stacked QKV weights, reshaped biases

    out = encoder_layer_forward(src, src_mask, prep, n_heads)
    out = jax.block_until_ready(out)

    ref = _reference_encoder_layer(src, src_mask, params, n_heads)
    assert out.shape == (batch, seq, hid_dim)
    err = jnp.max(jnp.abs(out - ref))
    assert jnp.allclose(out, ref, atol=1e-4, rtol=1e-4), f"max abs err = {err}"

    print("KERNEL_OK")
</pallas_src>

<mosaic_0001>
module attributes {stable_mosaic.version = 11 : i64} {
  func.func @_qkv_proj_kernel(%arg0: i32, %arg1: i32, %arg2: memref<8x32xf32, #tpu.memory_space<vmem>>, %arg3: memref<1x32x32xf32, #tpu.memory_space<vmem>>, %arg4: memref<1x1x32xf32, #tpu.memory_space<vmem>>, %arg5: memref<1x8x32xf32, #tpu.memory_space<vmem>>) attributes {dimension_semantics = [#tpu.dimension_semantics<parallel>, #tpu.dimension_semantics<parallel>], iteration_bounds = array<i64: 2, 3>, scalar_prefetch = 0 : i64, scratch_operands = 0 : i64, tpu.core_type = #tpu.core_type<tc>, window_params = [{transform_indices = @transform_0, window_bounds = array<i64: 8, 32>}, {transform_indices = @transform_1, window_bounds = array<i64: 1, 32, 32>}, {transform_indices = @transform_2, window_bounds = array<i64: 1, 1, 32>}, {transform_indices = @transform_3, window_bounds = array<i64: 1, 8, 32>}]} {
    %c0 = arith.constant 0 : index
    %c0_0 = arith.constant 0 : index
    %0 = vector.load %arg2[%c0, %c0_0] : memref<8x32xf32, #tpu.memory_space<vmem>>, vector<8x32xf32>
    %c0_1 = arith.constant 0 : index
    %c0_2 = arith.constant 0 : index
    %c0_3 = arith.constant 0 : index
    %1 = vector.load %arg3[%c0_1, %c0_2, %c0_3] : memref<1x32x32xf32, #tpu.memory_space<vmem>>, vector<1x32x32xf32>
    %2 = vector.shape_cast %1 : vector<1x32x32xf32> to vector<32x32xf32>
    %cst = arith.constant dense<0.000000e+00> : vector<8x32xf32>
    %3 = tpu.matmul %0, %2, %cst {dimension_numbers = #tpu.dot_dimension_numbers<[1], [0], [0], [1], [0, 0, 1, 1], [], []>} : vector<8x32xf32>, vector<32x32xf32>, vector<8x32xf32> -> vector<8x32xf32>
    %c0_4 = arith.constant 0 : index
    %c0_5 = arith.constant 0 : index
    %c0_6 = arith.constant 0 : index
    %4 = vector.load %arg4[%c0_4, %c0_5, %c0_6] : memref<1x1x32xf32, #tpu.memory_space<vmem>>, vector<1x1x32xf32>
    %5 = vector.shape_cast %4 : vector<1x1x32xf32> to vector<1x32xf32>
    %6 = vector.broadcast %5 : vector<1x32xf32> to vector<8x32xf32>
    %7 = arith.addf %3, %6 : vector<8x32xf32>
    %c0_7 = arith.constant 0 : index
    %c0_8 = arith.constant 0 : index
    %c0_9 = arith.constant 0 : index
    %8 = vector.load %arg5[%c0_7, %c0_8, %c0_9] : memref<1x8x32xf32, #tpu.memory_space<vmem>>, vector<1x8x32xf32>
    %9 = vector.shape_cast %8 : vector<1x8x32xf32> to vector<8x32xf32>
    %10 = vector.shape_cast %7 : vector<8x32xf32> to vector<1x8x32xf32>
    tpu.vector_store %arg5[%c0_7, %c0_8, %c0_9], %10 {strides = array<i32>} : memref<1x8x32xf32, #tpu.memory_space<vmem>>, vector<1x8x32xf32>,
    return
  }
  func.func @transform_0(%arg0: i32, %arg1: i32) -> (i32, i32) {
    %c0_i32 = arith.constant 0 : i32
    %c0_i32_0 = arith.constant 0 : i32
    return %arg0, %c0_i32 : i32, i32
  }
  func.func @transform_1(%arg0: i32, %arg1: i32) -> (i32, i32, i32) {
    %c0_i32 = arith.constant 0 : i32
    %c0_i32_0 = arith.constant 0 : i32
    %c0_i32_1 = arith.constant 0 : i32
    return %arg1, %c0_i32, %c0_i32_0 : i32, i32, i32
  }
  func.func @transform_2(%arg0: i32, %arg1: i32) -> (i32, i32, i32) {
    %c0_i32 = arith.constant 0 : i32
    %c0_i32_0 = arith.constant 0 : i32
    %c0_i32_1 = arith.constant 0 : i32
    return %arg1, %c0_i32, %c0_i32_0 : i32, i32, i32
  }
  func.func @transform_3(%arg0: i32, %arg1: i32) -> (i32, i32, i32) {
    %c0_i32 = arith.constant 0 : i32
    %c0_i32_0 = arith.constant 0 : i32
    return %arg1, %arg0, %c0_i32 : i32, i32, i32
  }
}

</mosaic_0001>

<llo_original>
// kernel: tpu_custom_call.1
$region0: #{tpu_custom_call.1}
  #allocation0 [shape = 'u32[]', space=smem, size = 0x4, offset = 0x4, fixed_abs, tag = 'smem constant byte address 0x4 - core index']
  #allocation1 [shape = 'u32[144,128]{1,0:T(1,128)}', space=vmem, size = 0x12000, scoped, tag = 'internal scratch']
  %s0 = inlined_call_operand.hbm [shape: f32[16,32], index: 0, kind: input, shape index: {}]
  %s1 = inlined_call_operand.hbm [shape: f32[3,32,32], index: 1, kind: input, shape index: {}]
  %s2 = inlined_call_operand.vmem [shape: f32[3,1,32], index: 2, kind: input, shape index: {}]
  %s3 = inlined_call_operand.hbm [shape: f32[3,16,32], index: 3, kind: output, shape index: {}]
  %s4 = sld [smem:[#allocation0]]
  $region53: #{tpu_custom_call.1} parent=0
    _
  %s6 = ssub.s32 1, %s4
  %s7 = scalar_select 0, %s6, %s4
  $region1: #{tpu_custom_call.1} parent=0
    #allocation2 [shape = 'u8[8192]{0}', space=vmem, size = 0x2000, scoped, tag = 'input window, operand 0']
    #allocation3 [shape = 's32[2]{0}', space=sflag, size = 0x8, scoped, tag = 'scoped memory for tpu_custom_call.1']
    #allocation4 [shape = 's32[2]{0}', space=sflag, size = 0x8, scoped, tag = 'scoped memory for tpu_custom_call.1']
    #allocation5 [shape = 'u8[32768]{0}', space=vmem, size = 0x8000, scoped, tag = 'input window, operand 1']
    #allocation6 [shape = 's32[2]{0}', space=sflag, size = 0x8, scoped, tag = 'scoped memory for tpu_custom_call.1']
    #allocation7 [shape = 'u8[8192]{0}', space=vmem, size = 0x2000, scoped, tag = 'output window, operand 0']
    %8 = vsyncpa [#allocation3], 0
    %s9 = scalar_lea.sflag [#allocation3], 1
    %10 = vsyncpa %s9, 0
    %11 = vsyncpa [#allocation6], 0
    %s12 = scalar_lea.sflag [#allocation6], 1
    %13 = vsyncpa %s12, 0
    %14 = vsyncpa [#allocation4], 0
    %s15 = scalar_lea.sflag [#allocation4], 1
    %16 = vsyncpa %s15, 0
    loop: start=0, step=1, limit=8
    $region2: #{tpu_custom_call.1} parent=1 // loop_pre_header
      _
    $region3: #{tpu_custom_call.1} parent=1 // loop_header
      %s18 = sphi 0, %s22
      %p19 = scmp.ge.s32.totalorder %s18, 8
      %s25 = sphi 0, %s37
      %s26 = sphi 0, %s33
      %s27 = sphi 0, %s25
      %s28 = sphi 0, %s26
      %s29 = sphi 0, %s27
      %s30 = sphi 0, %s28
      %s40 = sphi 0, %s42
      %s43 = sphi 0, %s40
      %s44 = sphi 0, %s43
      %s60 = sphi 0, %s44
      %s66 = sphi 0, %s68
      %s69 = sphi 0, %s66
      %s70 = sphi 0, %s69
      %s86 = sphi 0, %s70
      %s92 = sphi 0, %s94
      %s95 = sphi 0, %s92
      %s96 = sphi 0, %s95
      %s112 = sphi 0, %s96
      %s120 = sphi 0, %s122
      %s123 = sphi 0, %s120
      %s124 = sphi 0, %s123
      %s140 = sphi 0, %s124
    $region4: #{tpu_custom_call.1} parent=1 // loop_header_branch
      %21 = sbr.rel (%p19) target = $region8
    $region5: #{tpu_custom_call.1} parent=1 // loop_body
      %s23 = ssub.s32 %s18, 1
      %s24 = ssub.s32 %s18, 2
      %s31 = sadd.s32 1, %s26
      %p32 = scmp.ge.s32.totalorder %s31, 3
      %s33 = scalar_select %p32, 0, %s31
      %s34 = sadd.s32 1, %s25
      %s35 = scalar_select %p32, %s34, %s25
      %p36 = scmp.ge.s32.totalorder %s35, 2
      %s37 = scalar_select %p36, 0, %s35
      %s38 = ssub.s32 %s25, %s37
      %p39 = scmp.eq.s32.totalorder %s38, 0
      %s41 = sadd.s32 %s40, 1
      %s42 = scalar_select %p39, %s40, %s41
      %p45 = pneg %p39
      %p46 = scmp.eq.s32.totalorder %s18, 5
      %p47 = por %p45, %p46
      %p48 = scmp.ne.s32.totalorder %s40, %s43
      %p49 = scmp.eq.s32.totalorder %s18, 0
      %p50 = por %p48, %p49
      %p51 = scmp.ne.s32.totalorder %s40, %s43
      %p52 = scmp.eq.s32.totalorder %s23, 5
      %p53 = por %p51, %p52
      %p54 = scmp.ne.s32.totalorder %s43, %s44
      %p55 = scmp.eq.s32.totalorder %s23, 0
      %p56 = por %p54, %p55
      %p57 = scmp.ne.s32.totalorder %s43, %s44
      %p58 = scmp.eq.s32.totalorder %s24, 5
      %p59 = por %p57, %p58
      %p61 = scmp.ne.s32.totalorder %s44, %s60
      %p62 = scmp.eq.s32.totalorder %s24, 0
      %p63 = por %p61, %p62
      %s64 = ssub.s32 %s26, %s33
      %p65 = scmp.eq.s32.totalorder %s64, 0
      %s67 = sadd.s32 %s66, 1
      %s68 = scalar_select %p65, %s66, %s67
      %p71 = pneg %p65
      %p72 = scmp.eq.s32.totalorder %s18, 5
      %p73 = por %p71, %p72
      %p74 = scmp.ne.s32.totalorder %s66, %s69
      %p75 = scmp.eq.s32.totalorder %s18, 0
      %p76 = por %p74, %p75
      %p77 = scmp.ne.s32.totalorder %s66, %s69
      %p78 = scmp.eq.s32.totalorder %s23, 5
      %p79 = por %p77, %p78
      %p80 = scmp.ne.s32.totalorder %s69, %s70
      %p81 = scmp.eq.s32.totalorder %s23, 0
      %p82 = por %p80, %p81
      %p83 = scmp.ne.s32.totalorder %s69, %s70
      %p84 = scmp.eq.s32.totalorder %s24, 5
      %p85 = por %p83, %p84
      %p87 = scmp.ne.s32.totalorder %s70, %s86
      %p88 = scmp.eq.s32.totalorder %s24, 0
      %p89 = por %p87, %p88
      %s90 = ssub.s32 %s26, %s33
      %p91 = scmp.eq.s32.totalorder %s90, 0
      %s93 = sadd.s32 %s92, 1
      %s94 = scalar_select %p91, %s92, %s93
      %p97 = pneg %p91
      %p98 = scmp.eq.s32.totalorder %s18, 5
      %p99 = por %p97, %p98
      %p100 = scmp.ne.s32.totalorder %s92, %s95
      %p101 = scmp.eq.s32.totalorder %s18, 0
      %p102 = por %p100, %p101
      %p103 = scmp.ne.s32.totalorder %s92, %s95
      %p104 = scmp.eq.s32.totalorder %s23, 5
      %p105 = por %p103, %p104
      %p106 = scmp.ne.s32.totalorder %s95, %s96
      %p107 = scmp.eq.s32.totalorder %s23, 0
      %p108 = por %p106, %p107
      %p109 = scmp.ne.s32.totalorder %s95, %s96
      %p110 = scmp.eq.s32.totalorder %s24, 5
      %p111 = por %p109, %p110
      %p113 = scmp.ne.s32.totalorder %s96, %s112
      %p114 = scmp.eq.s32.totalorder %s24, 0
      %p115 = por %p113, %p114
      %s116 = ssub.s32 %s26, %s33
      %s117 = ssub.s32 %s25, %s37
      %s118 = sor.u32 %s116, %s117
      %p119 = scmp.eq.s32.totalorder %s118, 0
      %s121 = sadd.s32 %s120, 1
      %s122 = scalar_select %p119, %s120, %s121
      %p125 = pneg %p119
      %p126 = scmp.eq.s32.totalorder %s18, 5
      %p127 = por %p125, %p126
      %p128 = scmp.ne.s32.totalorder %s120, %s123
      %p129 = scmp.eq.s32.totalorder %s18, 0
      %p130 = por %p128, %p129
      %p131 = scmp.ne.s32.totalorder %s120, %s123
      %p132 = scmp.eq.s32.totalorder %s23, 5
      %p133 = por %p131, %p132
      %p134 = scmp.ne.s32.totalorder %s123, %s124
      %p135 = scmp.eq.s32.totalorder %s23, 0
      %p136 = por %p134, %p135
      %p137 = scmp.ne.s32.totalorder %s123, %s124
      %p138 = scmp.eq.s32.totalorder %s24, 5
      %p139 = por %p137, %p138
      %p141 = scmp.ne.s32.totalorder %s124, %s140
      %p142 = scmp.eq.s32.totalorder %s24, 0
      %p143 = por %p141, %p142
      %p144 = scmp.le.s32.totalorder 1, %s18
      %p145 = scmp.lt.s32.totalorder %s18, 7
      %p146 = pnand %p144, %p145
      %p147 = pneg %p146
      // Predicated region
      $region9: #{tpu_custom_call.1} parent=5 // pred_check
        _
      $region10: #{tpu_custom_call.1} parent=5 // pred_check_branch
        %149 = sbr.rel (%p146) target = $region12
      $region11: #{tpu_custom_call.1} parent=5 // pred_region
        %s150 = ssub.s32 %s18, 1
      $region12: #{tpu_custom_call.1} parent=5 // pred_fallthru
        _
      %p151 = scmp.lt.s32.totalorder %s18, 6
      // Predicated region
      $region13: #{tpu_custom_call.1} parent=5 // pred_check
        %p152 = pneg %p151
      $region14: #{tpu_custom_call.1} parent=5 // pred_check_branch
        %154 = sbr.rel (%p152) target = $region16
      $region15: #{tpu_custom_call.1} parent=5 // pred_region
        // Predicated region
        $region17: #{tpu_custom_call.1} parent=15 // pred_check
          %p155 = pneg %p50
        $region18: #{tpu_custom_call.1} parent=15 // pred_check_branch
          %157 = sbr.rel (%p155) target = $region20
        $region19: #{tpu_custom_call.1} parent=15 // pred_region
          %s158 = sand.u32 %s40, 1
          %s159 = scalar_lea.sflag [#allocation3], %s158
          %s160 = sand.u32 %s40, 1
          %s161 = smul.addr %s160, 8
          %s162 = scalar_lea.vmem [#allocation2], %s161
          %s164 = ssub.s32 128, 128
          %165 = vsyncadd %s159, %s164
          %s166 = smul.addr %s25, 128
          %s167 = scalar_lea.hbm %s0, %s166
          %s169 = sshll.u32 %s162, 4
          %s170 = int_to_ptr.vmem [resolvable:$true] %s169
          %172 = dma.hbm_to_vmem [thread:$0]  %s167, 128, %s170, %s159
        $region20: #{tpu_custom_call.1} parent=15 // pred_fallthru
          _
        // Predicated region
        $region21: #{tpu_custom_call.1} parent=15 // pred_check
          %p173 = pneg %p76
        $region22: #{tpu_custom_call.1} parent=15 // pred_check_branch
          %175 = sbr.rel (%p173) target = $region24
        $region23: #{tpu_custom_call.1} parent=15 // pred_region
          %s176 = sand.u32 %s66, 1
          %s177 = scalar_lea.sflag [#allocation6], %s176
          %s178 = sand.u32 %s66, 1
          %s179 = smul.addr %s178, 32
          %s180 = scalar_lea.vmem [#allocation5], %s179
          %s182 = ssub.s32 512, 512
          %183 = vsyncadd %s177, %s182
          %s184 = smul.addr %s26, 4
          %s185 = smul.addr %s184, 128
          %s186 = scalar_lea.hbm %s1, %s185
          %s187 = sshll.u32 %s180, 4
          %s188 = int_to_ptr.vmem [resolvable:$true] %s187
          %193 = dma.hbm_to_vmem [thread:$0]  %s186, 512, %s188, %s177, 128, 128, 8
        $region24: #{tpu_custom_call.1} parent=15 // pred_fallthru
          _
        // Predicated region
        $region25: #{tpu_custom_call.1} parent=15 // pred_check
          %p194 = pneg %p102
        $region26: #{tpu_custom_call.1} parent=15 // pred_check_branch
          %196 = sbr.rel (%p194) target = $region28
        $region27: #{tpu_custom_call.1} parent=15 // pred_region
          %p197 = scmp.lt.s32.totalorder %s26, 2
          %s198 = scalar_select %p197, %s26, 2
          %s199 = scalar_lea.vmem %s2, %s198
        $region28: #{tpu_custom_call.1} parent=15 // pred_fallthru
          _
      $region16: #{tpu_custom_call.1} parent=5 // pred_fallthru
        _
      %p200 = scmp.le.s32.totalorder 1, %s18
      %p201 = scmp.lt.s32.totalorder %s18, 7
      %p202 = pnand %p200, %p201
      %p203 = pneg %p202
      // Predicated region
      $region29: #{tpu_custom_call.1} parent=5 // pred_check
        _
      $region30: #{tpu_custom_call.1} parent=5 // pred_check_branch
        %205 = sbr.rel (%p202) target = $region32
      $region31: #{tpu_custom_call.1} parent=5 // pred_region
        %s206 = ssub.s32 %s18, 1
        %s207 = sand.u32 %s43, 1
        %s208 = scalar_lea.sflag [#allocation3], %s207
        %s209 = sand.u32 %s43, 1
        %s210 = smul.addr %s209, 8
        %s211 = scalar_lea.vmem [#allocation2], %s210
        // Predicated region
        $region33: #{tpu_custom_call.1} parent=31 // pred_check
          %p212 = pneg %p56
        $region34: #{tpu_custom_call.1} parent=31 // pred_check_branch
          %214 = sbr.rel (%p212) target = $region36
        $region35: #{tpu_custom_call.1} parent=31 // pred_region
          %215 = dma.done %s208, 128
        $region36: #{tpu_custom_call.1} parent=31 // pred_fallthru
          _
        %s216 = sand.u32 %s69, 1
        %s217 = scalar_lea.sflag [#allocation6], %s216
        %s218 = sand.u32 %s69, 1
        %s219 = smul.addr %s218, 32
        %s220 = scalar_lea.vmem [#allocation5], %s219
        // Predicated region
        $region37: #{tpu_custom_call.1} parent=31 // pred_check
          %p221 = pneg %p82
        $region38: #{tpu_custom_call.1} parent=31 // pred_check_branch
          %223 = sbr.rel (%p221) target = $region40
        $region39: #{tpu_custom_call.1} parent=31 // pred_region
          %224 = dma.done %s217, 512
        $region40: #{tpu_custom_call.1} parent=31 // pred_fallthru
          _
        %s225 = sand.u32 %s43, 1
        %s226 = scalar_lea.sflag [#allocation3], %s225
        %s227 = sand.u32 %s43, 1
        %s228 = smul.addr %s227, 8
        %s229 = scalar_lea.vmem [#allocation2], %s228
        %p230 = pneg %p56
        %p231 = pneg %p53
        %s232 = sand.u32 %s69, 1
        %s233 = scalar_lea.sflag [#allocation6], %s232
        %s234 = sand.u32 %s69, 1
        %s235 = smul.addr %s234, 32
        %s236 = scalar_lea.vmem [#allocation5], %s235
        %p237 = pneg %p82
        %p238 = pneg %p79
        %p239 = scmp.lt.s32.totalorder %s28, 2
        %s240 = scalar_select %p239, %s28, 2
        %s241 = scalar_lea.vmem %s2, %s240
        %p242 = pneg %p108
        %p243 = pneg %p105
        %p244 = pneg %p136
        %p245 = pneg %p133
        %s246 = sand.u32 %s123, 1
        %s247 = scalar_lea.sflag [#allocation4], %s246
        %s248 = sand.u32 %s123, 1
        %s249 = smul.addr %s248, 8
        %s250 = scalar_lea.vmem [#allocation7], %s249
        %p251 = scmp.lt.s32.totalorder %s28, 2
        %s252 = scalar_select %p251, %s28, 2
        %s253 = scalar_lea.vmem %s2, %s252
        %v254 = vld [vmem:[%s211] sm:$0xff]
        %v255 = vld [vmem:[%s220] sm:$0xff]
        %v256 = vld [vmem:[%s220 + $0x8] sm:$0xff]
        %v257 = vld [vmem:[%s220 + $0x10] sm:$0xff]
        %v258 = vld [vmem:[%s220 + $0x18] sm:$0xff]
        %v259 = vld [vmem:[%s253] sm:$0x1]
        %v261 = vlaneseq
        %v262 = vshrl.u32 %v261, 7
        %v263 = vsub.s32 0, %v262
        %v264 = vrot.slane %v259, %v263
        %vm266 = vcmask 261120
        %v268 = vsel %vm266, %v254, 0
        %270 = vmatprep.subr.mxu0 0.0
        %271 = vmatpush1.msra.mxu0 %v255
        %272 = vmatprep.subr.mxu0 0.0
        %273 = vmatpush1.msra.mxu0 %v256
        %274 = vmatprep.subr.mxu0 0.0
        %275 = vmatpush1.msra.mxu0 %v257
        %276 = vmatprep.subr.mxu0 0.0
        %277 = vmatpush1.msra.mxu0 %v258
        %278 = vmatprep.subr.mxu0 0.0
        %279 = vmatpush1.msra.mxu0 0.0
        %280 = vmatprep.subr.mxu0 0.0
        %281 = vmatpush1.msra.mxu0 0.0
        %282 = vmatprep.subr.mxu0 0.0
        %283 = vmatpush1.msra.mxu0 0.0
        %284 = vmatprep.subr.mxu0 0.0
        %285 = vmatpush1.msra.mxu0 0.0
        %286 = vmatprep.subr.mxu0 0.0
        %287 = vmatpush1.msra.mxu0 0.0
        %288 = vmatprep.subr.mxu0 0.0
        %289 = vmatpush1.msra.mxu0 0.0
        %290 = vmatprep.subr.mxu0 0.0
        %291 = vmatpush1.msra.mxu0 0.0
        %292 = vmatprep.subr.mxu0 0.0
        %293 = vmatpush1.msra.mxu0 0.0
        %294 = vmatprep.subr.mxu0 0.0
        %295 = vmatpush1.msra.mxu0 0.0
        %296 = vmatprep.subr.mxu0 0.0
        %297 = vmatpush1.msra.mxu0 0.0
        %298 = vmatprep.subr.mxu0 0.0
        %299 = vmatpush1.msra.mxu0 0.0
        %300 = vmatprep.subr.mxu0 0.0
        %301 = vmatpush1.msra.mxu0 0.0
        %302 = vmatprep.subr.mxu0 0.0
        %303 = vmatpush1.msra.mxu0 0.0
        %304 = vmatprep.subr.mxu0 0.0
        %305 = vmatpush1.msra.mxu0 0.0
        %306 = vmatprep.subr.mxu0 0.0
        %307 = vmatpush1.msra.mxu0 0.0
        %308 = vmatprep.subr.mxu0 0.0
        %309 = vmatpush1.msra.mxu0 0.0
        %310 = vmatprep.subr.mxu0 0.0
        %311 = vmatpush1.msra.mxu0 0.0
        %312 = vmatprep.subr.mxu0 0.0
        %313 = vmatpush1.msra.mxu0 0.0
        %314 = vmatprep.subr.mxu0 0.0
        %315 = vmatpush1.msra.mxu0 0.0
        %316 = vmatprep.subr.mxu0 0.0
        %317 = vmatpush1.msra.mxu0 0.0
        %318 = vmatprep.subr.mxu0 0.0
        %319 = vmatpush1.msra.mxu0 0.0
        %320 = vmatprep.subr.mxu0 0.0
        %321 = vmatpush1.msra.mxu0 0.0
        %322 = vmatprep.subr.mxu0 0.0
        %323 = vmatpush1.msra.mxu0 0.0
        %324 = vmatprep.subr.mxu0 0.0
        %325 = vmatpush1.msra.mxu0 0.0
        %326 = vmatprep.subr.mxu0 0.0
        %327 = vmatpush1.msra.mxu0 0.0
        %328 = vmatprep.subr.mxu0 0.0
        %329 = vmatpush1.msra.mxu0 0.0
        %330 = vmatprep.subr.mxu0 0.0
        %331 = vmatpush1.msra.mxu0 0.0
        %332 = vmatprep.subr.mxu0 0.0
        %333 = vmatpush1.msra.mxu0 0.0
        %334 = vmatprep.mubr.f32.mxu0 0.0
        %335 = vmatmul.mubr.f32.gmra.mrb[0].mxu0 %v268
        %v336 = vpop.f32.mrb[0].mxu0
        %v337 = vadd.f32 %v264, %v336
        %v338 = vpop.f32.mrb[0].mxu0
        %339 = vdwg.mxu0
        %340 = vst.msk [vmem:[%s250] sm:$0xff] %vm266, %v337
        %s341 = sand.u32 %s123, 1
        %s342 = scalar_lea.sflag [#allocation4], %s341
        %s343 = sand.u32 %s123, 1
        %s344 = smul.addr %s343, 8
        %s345 = scalar_lea.vmem [#allocation7], %s344
        // Predicated region
        $region41: #{tpu_custom_call.1} parent=31 // pred_check
          %p346 = pneg %p133
        $region42: #{tpu_custom_call.1} parent=31 // pred_check_branch
          %348 = sbr.rel (%p346) target = $region44
        $region43: #{tpu_custom_call.1} parent=31 // pred_region
          %s350 = ssub.s32 128, 128
          %351 = vsyncadd %s342, %s350
          %s352 = smul.addr %s28, 2
          %s353 = sadd.s32 %s27, %s352
          %s354 = smul.addr %s353, 128
          %s355 = scalar_lea.hbm %s3, %s354
          %s357 = sshll.u32 %s345, 4
          %s358 = int_to_ptr.vmem [resolvable:$true] %s357
          %360 = dma.vmem_to_hbm [thread:$0]  %s358, 128, %s355, %s342
        $region44: #{tpu_custom_call.1} parent=31 // pred_fallthru
          _
      $region32: #{tpu_custom_call.1} parent=5 // pred_fallthru
        _
      %p361 = scmp.le.s32.totalorder 2, %s18
      // Predicated region
      $region45: #{tpu_custom_call.1} parent=5 // pred_check
        %p362 = pneg %p361
      $region46: #{tpu_custom_call.1} parent=5 // pred_check_branch
        %364 = sbr.rel (%p362) target = $region48
      $region47: #{tpu_custom_call.1} parent=5 // pred_region
        %s365 = ssub.s32 %s18, 2
        // Predicated region
        $region49: #{tpu_custom_call.1} parent=47 // pred_check
          %p366 = pneg %p139
        $region50: #{tpu_custom_call.1} parent=47 // pred_check_branch
          %368 = sbr.rel (%p366) target = $region52
        $region51: #{tpu_custom_call.1} parent=47 // pred_region
          %s369 = sand.u32 %s124, 1
          %s370 = scalar_lea.sflag [#allocation4], %s369
          %s371 = sand.u32 %s124, 1
          %s372 = smul.addr %s371, 8
          %s373 = scalar_lea.vmem [#allocation7], %s372
          %374 = dma.done %s370, 128
        $region52: #{tpu_custom_call.1} parent=47 // pred_fallthru
          _
      $region48: #{tpu_custom_call.1} parent=5 // pred_fallthru
        _
    $region6: #{tpu_custom_call.1} parent=1 // loop_footer
      %s22 = sadd.s32 1, %s18
    $region7: #{tpu_custom_call.1} parent=1 // loop_footer_branch
      %17 = sbr.rel target = $region3
    $region8: #{tpu_custom_call.1} parent=1 // loop_exit
      _
    %375 = vsyncpa [#allocation3], 1
    %s376 = scalar_lea.sflag [#allocation3], 1
    %377 = vsyncpa %s376, 1
    %378 = vsyncpa [#allocation6], 1
    %s379 = scalar_lea.sflag [#allocation6], 1
    %380 = vsyncpa %s379, 1
    %381 = vsyncpa [#allocation4], 1
    %s382 = scalar_lea.sflag [#allocation4], 1
    %383 = vsyncpa %s382, 1

</llo_original>
